<compile_context>
chip_gen: v7x
topology: tpu7x:2x2x1
jax: 0.10.0
libtpu: 0.0.40
codegen_flags: <defaults>
</compile_context>

<pallas_src>
import jax
import jax.numpy as jnp
from jax import lax
from jax.experimental import pallas as pl
from jax.experimental.pallas import tpu as pltpu

HIDDEN = 32          # hidden_size
U_SIZE = 100         # number of users
V_SIZE = 120         # number of items
MID = 256            # MLP hidden width (only used for parameter shapes)
BN_EPS = 1e-5

U_PAD = ((U_SIZE + 127) // 128) * 128     # 128
V_PAD = ((V_SIZE + 127) // 128) * 128     # 128
K_TOT = U_PAD + V_PAD                     # 256 : stacked su || sv length
BM_MAX = 2048        # max batch tile (lane dimension of the output row)


def _round_up(a, m):
    return ((a + m - 1) // m) * m


def cf_kernel(u_ref, v_ref, w_ref, o_ref):
    # u_ref: (1, BM) int32   user ids for this batch tile
    # v_ref: (1, BM) int32   item ids for this batch tile
    # w_ref: (1, K_TOT) f32  stacked per-id scores [su (+bias) || sv], zero-padded
    # o_ref: (1, BM) f32     lane-dense sigmoid probabilities
    k = w_ref.shape[1]
    bm = o_ref.shape[1]

    # Two-hot gather matrix: row u[b] (user score) and row U_PAD + v[b]
    # (item score) are 1 for column b. u < U_SIZE <= U_PAD so no collision.
    iota = lax.broadcasted_iota(jnp.int32, (k, bm), 0)
    hit = (iota == u_ref[...]) | (iota == (v_ref[...] + U_PAD))
    onehot = hit.astype(jnp.float32)                               # (K, BM)

    # Single MXU push: (1, K) @ (K, BM) -> (1, BM). The bias is pre-folded
    # into the su half of w_ref, so the logit is complete here.
    logit = jnp.dot(w_ref[...], onehot,
                    preferred_element_type=jnp.float32)            # (1, BM)
    o_ref[...] = jax.nn.sigmoid(logit).astype(o_ref.dtype)


def cf_forward(u, v, params):
    """u, v: int32 index arrays of shape (B, 1) — mirrors emb(u).squeeze(1)."""
    emb_u = params["emb_u"]     # (U_SIZE, HIDDEN)
    emb_v = params["emb_v"]     # (V_SIZE, HIDDEN)
    w1 = params["w1"]           # (2*HIDDEN, 256)  == PyTorch Linear.weight.T
    w2 = params["w2"]           # (256, 1)         == PyTorch Linear.weight.T
    gamma = params["bn_gamma"]  # (1, 256)
    beta = params["bn_beta"]    # (1, 256)
    mean = params["bn_mean"]    # (1, 256)
    var = params["bn_var"]      # (1, 256)

    # ---- trace-time constant folding (eval-mode BN + both Linears) ----------
    # BN(h) = h*s + (beta - mean*s),  s = gamma * rsqrt(var + eps)
    # sigmoid(BN(x @ W1) @ w2) == sigmoid(x @ w_eff + b_eff)
    s = gamma * lax.rsqrt(var + BN_EPS)            # (1, 256)
    w_eff = w1 @ (w2 * s.T)                        # (2H, 1)
    b_eff = (beta - mean * s) @ w2                 # (1, 1)

    # ---- fold the embedding tables through w_eff into per-id scalars --------
    # x @ w_eff = emb_u[u] @ w_eff[:H] + emb_v[v] @ w_eff[H:] = su[u] + sv[v]
    # Bias is absorbed into su (every sample hits exactly one user slot).
    su = (emb_u @ w_eff[:HIDDEN]).reshape(-1) + b_eff[0, 0]        # (U_SIZE,)
    sv = (emb_v @ w_eff[HIDDEN:]).reshape(-1)                      # (V_SIZE,)
    w_row = jnp.concatenate([
        jnp.pad(su, (0, U_PAD - U_SIZE)),
        jnp.pad(sv, (0, V_PAD - V_SIZE)),
    ]).reshape(1, K_TOT)                                           # (1, 256)

    # ---- index streams (only HBM traffic besides the output) ----------------
    B = u.shape[0]
    u_row = u.reshape(1, B).astype(jnp.int32)
    v_row = v.reshape(1, B).astype(jnp.int32)

    # Batch tiling: full-array block for small B; otherwise >=2 tiles (v7x
    # megacore) of lane-aligned width, capped at BM_MAX.  No padding — the
    # ragged last block is masked by Pallas on store.
    if B <= 256:
        bm = B
    else:
        bm = min(BM_MAX, _round_up(pl.cdiv(B, 2), 128))
    n_tiles = pl.cdiv(B, bm)

    out = pl.pallas_call(
        cf_kernel,
        out_shape=jax.ShapeDtypeStruct((1, B), jnp.float32),
        grid=(n_tiles,),
        in_specs=[
            pl.BlockSpec((1, bm), lambda i: (0, i)),       # user ids tile
            pl.BlockSpec((1, bm), lambda i: (0, i)),       # item ids tile
            pl.BlockSpec((1, K_TOT), lambda i: (0, 0)),    # stacked score row
        ],
        out_specs=pl.BlockSpec((1, bm), lambda i: (0, i)),
        compiler_params=pltpu.CompilerParams(
            dimension_semantics=("parallel",)),
    )(u_row, v_row, w_row)

    # lane-dense (1, B) row -> (B, 1) column (tiny; matches PyTorch shape)
    return out.reshape(B, 1)


def init_params(key):
    """Deterministic synthetic parameter init (shapes match the PyTorch module)."""
    k_eu, k_ev, k_w1, k_w2, k_mean, k_var = jax.random.split(key, 6)
    params = {
        # nn.Embedding default init ~ N(0, 1)
        "emb_u": jax.random.normal(k_eu, (U_SIZE, HIDDEN), jnp.float32),
        "emb_v": jax.random.normal(k_ev, (V_SIZE, HIDDEN), jnp.float32),
        # Linear weights stored transposed: (in, out)
        "w1": jax.random.normal(k_w1, (2 * HIDDEN, MID), jnp.float32) * 0.05,
        "w2": jax.random.normal(k_w2, (MID, 1), jnp.float32) * 0.05,
        # BatchNorm1d params / running stats (eval-mode)
        "bn_gamma": jnp.ones((1, MID), jnp.float32),
        "bn_beta": jnp.zeros((1, MID), jnp.float32),
        "bn_mean": jax.random.normal(k_mean, (1, MID), jnp.float32) * 0.1,
        "bn_var": jnp.abs(jax.random.normal(k_var, (1, MID), jnp.float32)) * 0.5 + 0.5,
    }
    return params


def reference_forward(u, v, params):
    """Pure-JAX reference matching the PyTorch eval-mode forward (unfolded)."""
    eu = jnp.take(params["emb_u"], u[:, 0], axis=0)
    ev = jnp.take(params["emb_v"], v[:, 0], axis=0)
    x = jnp.concatenate([eu, ev], axis=1)
    h = x @ params["w1"]
    h = (h - params["bn_mean"]) / jnp.sqrt(params["bn_var"] + BN_EPS) \
        * params["bn_gamma"] + params["bn_beta"]
    return jax.nn.sigmoid(h @ params["w2"])


if __name__ == "__main__":
    key = jax.random.PRNGKey(0)
    k_params, k_u, k_v, k_u2, k_v2 = jax.random.split(key, 5)

    params = init_params(k_params)

    # Small batch: single full-array block (non-128-aligned lane width).
    B1 = 10
    u1 = jax.random.randint(k_u, (B1, 1), 0, U_SIZE, dtype=jnp.int32)
    v1 = jax.random.randint(k_v, (B1, 1), 0, V_SIZE, dtype=jnp.int32)
    out1 = jax.block_until_ready(cf_forward(u1, v1, params))
    ref1 = reference_forward(u1, v1, params)
    assert out1.shape == (B1, 1)
    # Folded weights change rounding order slightly vs the unfolded reference.
    assert jnp.allclose(out1, ref1, atol=5e-5, rtol=5e-5), "mismatch (B=10)"

    # Larger batch: multi-tile grid with a ragged (masked) last block.
    B2 = 300
    u2 = jax.random.randint(k_u2, (B2, 1), 0, U_SIZE, dtype=jnp.int32)
    v2 = jax.random.randint(k_v2, (B2, 1), 0, V_SIZE, dtype=jnp.int32)
    out2 = jax.block_until_ready(cf_forward(u2, v2, params))
    ref2 = reference_forward(u2, v2, params)
    assert out2.shape == (B2, 1)
    assert jnp.allclose(out2, ref2, atol=5e-5, rtol=5e-5), "mismatch (B=300)"

    print("KERNEL_OK")
</pallas_src>

<mosaic_0001>
module attributes {stable_mosaic.version = 11 : i64} {
  func.func @cf_kernel(%arg0: i32, %arg1: memref<1x10xi32, #tpu.memory_space<vmem>>, %arg2: memref<1x10xi32, #tpu.memory_space<vmem>>, %arg3: memref<1x256xf32, #tpu.memory_space<vmem>>, %arg4: memref<1x10xf32, #tpu.memory_space<vmem>>) attributes {dimension_semantics = [#tpu.dimension_semantics<parallel>], iteration_bounds = array<i64: 1>, scalar_prefetch = 0 : i64, scratch_operands = 0 : i64, tpu.core_type = #tpu.core_type<tc>, window_params = [{transform_indices = @transform_0, window_bounds = array<i64: 1, 10>}, {transform_indices = @transform_1, window_bounds = array<i64: 1, 10>}, {pipeline_mode = #tpu.pipeline_mode<synchronous>, transform_indices = @transform_2, window_bounds = array<i64: 1, 256>}, {transform_indices = @transform_3, window_bounds = array<i64: 1, 10>}]} {
    %0 = tpu.iota {dimensions = array<i32: 0>} : vector<256x10xi32>
    %c0 = arith.constant 0 : index
    %c0_0 = arith.constant 0 : index
    %1 = vector.load %arg1[%c0, %c0_0] : memref<1x10xi32, #tpu.memory_space<vmem>>, vector<1x10xi32>
    %2 = vector.broadcast %1 : vector<1x10xi32> to vector<256x10xi32>
    %3 = arith.cmpi eq, %0, %2 : vector<256x10xi32>
    %c0_1 = arith.constant 0 : index
    %c0_2 = arith.constant 0 : index
    %4 = vector.load %arg2[%c0_1, %c0_2] : memref<1x10xi32, #tpu.memory_space<vmem>>, vector<1x10xi32>
    %c128_i32 = arith.constant 128 : i32
    %5 = vector.broadcast %c128_i32 : i32 to vector<1x10xi32>
    %6 = arith.addi %4, %5 : vector<1x10xi32>
    %7 = vector.broadcast %6 : vector<1x10xi32> to vector<256x10xi32>
    %8 = arith.cmpi eq, %0, %7 : vector<256x10xi32>
    %9 = arith.ori %3, %8 : vector<256x10xi1>
    %10 = arith.extui %9 : vector<256x10xi1> to vector<256x10xi32>
    %11 = arith.sitofp %10 : vector<256x10xi32> to vector<256x10xf32>
    %c0_3 = arith.constant 0 : index
    %c0_4 = arith.constant 0 : index
    %12 = vector.load %arg3[%c0_3, %c0_4] : memref<1x256xf32, #tpu.memory_space<vmem>>, vector<1x256xf32>
    %cst = arith.constant dense<0.000000e+00> : vector<1x10xf32>
    %13 = tpu.matmul %12, %11, %cst {dimension_numbers = #tpu.dot_dimension_numbers<[1], [0], [0], [1], [0, 0, 1, 1], [], []>} : vector<1x256xf32>, vector<256x10xf32>, vector<1x10xf32> -> vector<1x10xf32>
    %14 = arith.negf %13 : vector<1x10xf32>
    %15 = math.exp %14 : vector<1x10xf32>
    %cst_5 = arith.constant 1.000000e+00 : f32
    %16 = vector.broadcast %cst_5 : f32 to vector<1x10xf32>
    %17 = arith.addf %16, %15 : vector<1x10xf32>
    %18 = arith.divf %16, %17 : vector<1x10xf32>
    %c0_6 = arith.constant 0 : index
    %c0_7 = arith.constant 0 : index
    %19 = vector.load %arg4[%c0_6, %c0_7] : memref<1x10xf32, #tpu.memory_space<vmem>>, vector<1x10xf32>
    tpu.vector_store %arg4[%c0_6, %c0_7], %18 {strides = array<i32>} : memref<1x10xf32, #tpu.memory_space<vmem>>, vector<1x10xf32>,
    return
  }
  func.func @transform_0(%arg0: i32) -> (i32, i32) {
    %c0_i32 = arith.constant 0 : i32
    %c0_i32_0 = arith.constant 0 : i32
    return %c0_i32, %arg0 : i32, i32
  }
  func.func @transform_1(%arg0: i32) -> (i32, i32) {
    %c0_i32 = arith.constant 0 : i32
    %c0_i32_0 = arith.constant 0 : i32
    return %c0_i32, %arg0 : i32, i32
  }
  func.func @transform_2(%arg0: i32) -> (i32, i32) {
    %c0_i32 = arith.constant 0 : i32
    %c0_i32_0 = arith.constant 0 : i32
    %c0_i32_1 = arith.constant 0 : i32
    return %c0_i32, %c0_i32_0 : i32, i32
  }
  func.func @transform_3(%arg0: i32) -> (i32, i32) {
    %c0_i32 = arith.constant 0 : i32
    %c0_i32_0 = arith.constant 0 : i32
    return %c0_i32, %arg0 : i32, i32
  }
}

</mosaic_0001>

<llo_original>
// kernel: tpu_custom_call.1
$region0: #{tpu_custom_call.1}
  #allocation0 [shape = 'u32[]', space=smem, size = 0x4, offset = 0x4, fixed_abs, tag = 'smem constant byte address 0x4 - core index']
  #allocation1 [shape = 'u32[144,128]{1,0:T(1,128)}', space=vmem, size = 0x12000, scoped, tag = 'internal scratch']
  %s0 = inlined_call_operand.hbm [shape: s32[1,10], index: 0, kind: input, shape index: {}]
  %s1 = inlined_call_operand.vmem [shape: s32[1,10], index: 1, kind: input, shape index: {}]
  %s2 = inlined_call_operand.vmem [shape: f32[1,256], index: 2, kind: input, shape index: {}]
  %s3 = inlined_call_operand.hbm [shape: f32[1,10], index: 3, kind: output, shape index: {}]
  %s4 = sld [smem:[#allocation0]]
  $region26: #{tpu_custom_call.1} parent=0
    _
  %s6 = ssub.s32 1, %s4
  %s7 = scalar_select 0, %s6, %s4
  $region1: #{tpu_custom_call.1} parent=0
    #allocation2 [shape = 'u8[512]{0}', space=vmem, size = 0x400, scoped, tag = 'input window, operand 0, single buffered']
    #allocation3 [shape = 's32[1]{0}', space=sflag, size = 0x4, scoped, tag = 'scoped memory for tpu_custom_call.1']
    #allocation4 [shape = 's32[1]{0}', space=sflag, size = 0x4, scoped, tag = 'scoped memory for tpu_custom_call.1']
    #allocation5 [shape = 'u8[512]{0}', space=vmem, size = 0x400, scoped, tag = 'output window, operand 0, single buffered']
    %8 = vsyncpa [#allocation3], 0
    %9 = vsyncpa [#allocation4], 0
    // Predicated region
    $region2: #{tpu_custom_call.1} parent=1 // pred_check
      _
    $region3: #{tpu_custom_call.1} parent=1 // pred_check_branch
      %11 = sbr.rel (0) target = $region5
    $region4: #{tpu_custom_call.1} parent=1 // pred_region
      %s13 = ssub.s32 16, 16
      %14 = vsyncadd [#allocation3], %s13
      %s16 = sshll.u32 [#allocation2], 4
      %s17 = int_to_ptr.vmem [resolvable:$true] %s16
      %19 = dma.hbm_to_vmem [thread:$0]  %s0, 16, %s17, [#allocation3]
    $region5: #{tpu_custom_call.1} parent=1 // pred_fallthru
      _
    // Predicated region
    $region6: #{tpu_custom_call.1} parent=1 // pred_check
      _
    $region7: #{tpu_custom_call.1} parent=1 // pred_check_branch
      %21 = sbr.rel (0) target = $region9
    $region8: #{tpu_custom_call.1} parent=1 // pred_region
      _
    $region9: #{tpu_custom_call.1} parent=1 // pred_fallthru
      _
    // Predicated region
    $region10: #{tpu_custom_call.1} parent=1 // pred_check
      _
    $region11: #{tpu_custom_call.1} parent=1 // pred_check_branch
      %23 = sbr.rel (0) target = $region13
    $region12: #{tpu_custom_call.1} parent=1 // pred_region
      _
    $region13: #{tpu_custom_call.1} parent=1 // pred_fallthru
      _
    // Predicated region
    $region14: #{tpu_custom_call.1} parent=1 // pred_check
      _
    $region15: #{tpu_custom_call.1} parent=1 // pred_check_branch
      %25 = sbr.rel (0) target = $region17
    $region16: #{tpu_custom_call.1} parent=1 // pred_region
      %26 = dma.done [#allocation3], 16
    $region17: #{tpu_custom_call.1} parent=1 // pred_fallthru
      _
    %v27 = vlaneseq
    %v28 = vshrl.u32 %v27, 7
    %v29 = vadd.s32 %v28, 8
    %v30 = vadd.s32 %v28, 16
    %v31 = vadd.s32 %v28, 24
    %v32 = vadd.s32 %v28, 32
    %v33 = vadd.s32 %v28, 40
    %v34 = vadd.s32 %v28, 48
    %v35 = vadd.s32 %v28, 56
    %v36 = vadd.s32 %v28, 64
    %v37 = vadd.s32 %v28, 72
    %v38 = vadd.s32 %v28, 80
    %v39 = vadd.s32 %v28, 88
    %v40 = vadd.s32 %v28, 96
    %v41 = vadd.s32 %v28, 104
    %v42 = vadd.s32 %v28, 112
    %v43 = vadd.s32 %v28, 120
    %v44 = vadd.s32 %v28, 128
    %v45 = vadd.s32 %v28, 136
    %v46 = vadd.s32 %v28, 144
    %v47 = vadd.s32 %v28, 152
    %v48 = vadd.s32 %v28, 160
    %v49 = vadd.s32 %v28, 168
    %v50 = vadd.s32 %v28, 176
    %v51 = vadd.s32 %v28, 184
    %v52 = vadd.s32 %v28, 192
    %v53 = vadd.s32 %v28, 200
    %v54 = vadd.s32 %v28, 208
    %v55 = vadd.s32 %v28, 216
    %v56 = vadd.s32 %v28, 224
    %v57 = vadd.s32 %v28, 232
    %v58 = vadd.s32 %v28, 240
    %v59 = vadd.s32 %v28, 248
    %v60 = vld [vmem:[#allocation2] sm:$0x1]
    %v61 = vlaneseq
    %v62 = vshrl.u32 %v61, 7
    %v63 = vsub.s32 0, %v62
    %v64 = vrot.slane %v60, %v63
    %vm65 = vcmp.eq.s32.totalorder %v28, %v64
    %vm66 = vcmp.eq.s32.totalorder %v29, %v64
    %vm67 = vcmp.eq.s32.totalorder %v30, %v64
    %vm68 = vcmp.eq.s32.totalorder %v31, %v64
    %vm69 = vcmp.eq.s32.totalorder %v32, %v64
    %vm70 = vcmp.eq.s32.totalorder %v33, %v64
    %vm71 = vcmp.eq.s32.totalorder %v34, %v64
    %vm72 = vcmp.eq.s32.totalorder %v35, %v64
    %vm73 = vcmp.eq.s32.totalorder %v36, %v64
    %vm74 = vcmp.eq.s32.totalorder %v37, %v64
    %vm75 = vcmp.eq.s32.totalorder %v38, %v64
    %vm76 = vcmp.eq.s32.totalorder %v39, %v64
    %vm77 = vcmp.eq.s32.totalorder %v40, %v64
    %vm78 = vcmp.eq.s32.totalorder %v41, %v64
    %vm79 = vcmp.eq.s32.totalorder %v42, %v64
    %vm80 = vcmp.eq.s32.totalorder %v43, %v64
    %vm81 = vcmp.eq.s32.totalorder %v44, %v64
    %vm82 = vcmp.eq.s32.totalorder %v45, %v64
    %vm83 = vcmp.eq.s32.totalorder %v46, %v64
    %vm84 = vcmp.eq.s32.totalorder %v47, %v64
    %vm85 = vcmp.eq.s32.totalorder %v48, %v64
    %vm86 = vcmp.eq.s32.totalorder %v49, %v64
    %vm87 = vcmp.eq.s32.totalorder %v50, %v64
    %vm88 = vcmp.eq.s32.totalorder %v51, %v64
    %vm89 = vcmp.eq.s32.totalorder %v52, %v64
    %vm90 = vcmp.eq.s32.totalorder %v53, %v64
    %vm91 = vcmp.eq.s32.totalorder %v54, %v64
    %vm92 = vcmp.eq.s32.totalorder %v55, %v64
    %vm93 = vcmp.eq.s32.totalorder %v56, %v64
    %vm94 = vcmp.eq.s32.totalorder %v57, %v64
    %vm95 = vcmp.eq.s32.totalorder %v58, %v64
    %vm96 = vcmp.eq.s32.totalorder %v59, %v64
    %v97 = vld [vmem:[%s1] sm:$0x1]
    %v98 = vadd.s32 %v97, 128
    %v99 = vlaneseq
    %v100 = vshrl.u32 %v99, 7
    %v101 = vsub.s32 0, %v100
    %v102 = vrot.slane %v98, %v101
    %vm103 = vcmp.eq.s32.totalorder %v28, %v102
    %vm104 = vcmp.eq.s32.totalorder %v29, %v102
    %vm105 = vcmp.eq.s32.totalorder %v30, %v102
    %vm106 = vcmp.eq.s32.totalorder %v31, %v102
    %vm107 = vcmp.eq.s32.totalorder %v32, %v102
    %vm108 = vcmp.eq.s32.totalorder %v33, %v102
    %vm109 = vcmp.eq.s32.totalorder %v34, %v102
    %vm110 = vcmp.eq.s32.totalorder %v35, %v102
    %vm111 = vcmp.eq.s32.totalorder %v36, %v102
    %vm112 = vcmp.eq.s32.totalorder %v37, %v102
    %vm113 = vcmp.eq.s32.totalorder %v38, %v102
    %vm114 = vcmp.eq.s32.totalorder %v39, %v102
    %vm115 = vcmp.eq.s32.totalorder %v40, %v102
    %vm116 = vcmp.eq.s32.totalorder %v41, %v102
    %vm117 = vcmp.eq.s32.totalorder %v42, %v102
    %vm118 = vcmp.eq.s32.totalorder %v43, %v102
    %vm119 = vcmp.eq.s32.totalorder %v44, %v102
    %vm120 = vcmp.eq.s32.totalorder %v45, %v102
    %vm121 = vcmp.eq.s32.totalorder %v46, %v102
    %vm122 = vcmp.eq.s32.totalorder %v47, %v102
    %vm123 = vcmp.eq.s32.totalorder %v48, %v102
    %vm124 = vcmp.eq.s32.totalorder %v49, %v102
    %vm125 = vcmp.eq.s32.totalorder %v50, %v102
    %vm126 = vcmp.eq.s32.totalorder %v51, %v102
    %vm127 = vcmp.eq.s32.totalorder %v52, %v102
    %vm128 = vcmp.eq.s32.totalorder %v53, %v102
    %vm129 = vcmp.eq.s32.totalorder %v54, %v102
    %vm130 = vcmp.eq.s32.totalorder %v55, %v102
    %vm131 = vcmp.eq.s32.totalorder %v56, %v102
    %vm132 = vcmp.eq.s32.totalorder %v57, %v102
    %vm133 = vcmp.eq.s32.totalorder %v58, %v102
    %vm134 = vcmp.eq.s32.totalorder %v59, %v102
    %vm135 = vmor %vm65, %vm103
    %vm136 = vmor %vm66, %vm104
    %vm137 = vmor %vm67, %vm105
    %vm138 = vmor %vm68, %vm106
    %vm139 = vmor %vm69, %vm107
    %vm140 = vmor %vm70, %vm108
    %vm141 = vmor %vm71, %vm109
    %vm142 = vmor %vm72, %vm110
    %vm143 = vmor %vm73, %vm111
    %vm144 = vmor %vm74, %vm112
    %vm145 = vmor %vm75, %vm113
    %vm146 = vmor %vm76, %vm114
    %vm147 = vmor %vm77, %vm115
    %vm148 = vmor %vm78, %vm116
    %vm149 = vmor %vm79, %vm117
    %vm150 = vmor %vm80, %vm118
    %vm151 = vmor %vm81, %vm119
    %vm152 = vmor %vm82, %vm120
    %vm153 = vmor %vm83, %vm121
    %vm154 = vmor %vm84, %vm122
    %vm155 = vmor %vm85, %vm123
    %vm156 = vmor %vm86, %vm124
    %vm157 = vmor %vm87, %vm125
    %vm158 = vmor %vm88, %vm126
    %vm159 = vmor %vm89, %vm127
    %vm160 = vmor %vm90, %vm128
    %vm161 = vmor %vm91, %vm129
    %vm162 = vmor %vm92, %vm130
    %vm163 = vmor %vm93, %vm131
    %vm164 = vmor %vm94, %vm132
    %vm165 = vmor %vm95, %vm133
    %vm166 = vmor %vm96, %vm134
    %v167 = vsel %vm135, 1, 0
    %v168 = vsel %vm136, 1, 0
    %v169 = vsel %vm137, 1, 0
    %v170 = vsel %vm138, 1, 0
    %v171 = vsel %vm139, 1, 0
    %v172 = vsel %vm140, 1, 0
    %v173 = vsel %vm141, 1, 0
    %v174 = vsel %vm142, 1, 0
    %v175 = vsel %vm143, 1, 0
    %v176 = vsel %vm144, 1, 0
    %v177 = vsel %vm145, 1, 0
    %v178 = vsel %vm146, 1, 0
    %v179 = vsel %vm147, 1, 0
    %v180 = vsel %vm148, 1, 0
    %v181 = vsel %vm149, 1, 0
    %v182 = vsel %vm150, 1, 0
    %v183 = vsel %vm151, 1, 0
    %v184 = vsel %vm152, 1, 0
    %v185 = vsel %vm153, 1, 0
    %v186 = vsel %vm154, 1, 0
    %v187 = vsel %vm155, 1, 0
    %v188 = vsel %vm156, 1, 0
    %v189 = vsel %vm157, 1, 0
    %v190 = vsel %vm158, 1, 0
    %v191 = vsel %vm159, 1, 0
    %v192 = vsel %vm160, 1, 0
    %v193 = vsel %vm161, 1, 0
    %v194 = vsel %vm162, 1, 0
    %v195 = vsel %vm163, 1, 0
    %v196 = vsel %vm164, 1, 0
    %v197 = vsel %vm165, 1, 0
    %v198 = vsel %vm166, 1, 0
    %v199 = vcvt.s32.f32 %v167
    %v200 = vcvt.s32.f32 %v168
    %v201 = vcvt.s32.f32 %v169
    %v202 = vcvt.s32.f32 %v170
    %v203 = vcvt.s32.f32 %v171
    %v204 = vcvt.s32.f32 %v172
    %v205 = vcvt.s32.f32 %v173
    %v206 = vcvt.s32.f32 %v174
    %v207 = vcvt.s32.f32 %v175
    %v208 = vcvt.s32.f32 %v176
    %v209 = vcvt.s32.f32 %v177
    %v210 = vcvt.s32.f32 %v178
    %v211 = vcvt.s32.f32 %v179
    %v212 = vcvt.s32.f32 %v180
    %v213 = vcvt.s32.f32 %v181
    %v214 = vcvt.s32.f32 %v182
    %v215 = vcvt.s32.f32 %v183
    %v216 = vcvt.s32.f32 %v184
    %v217 = vcvt.s32.f32 %v185
    %v218 = vcvt.s32.f32 %v186
    %v219 = vcvt.s32.f32 %v187
    %v220 = vcvt.s32.f32 %v188
    %v221 = vcvt.s32.f32 %v189
    %v222 = vcvt.s32.f32 %v190
    %v223 = vcvt.s32.f32 %v191
    %v224 = vcvt.s32.f32 %v192
    %v225 = vcvt.s32.f32 %v193
    %v226 = vcvt.s32.f32 %v194
    %v227 = vcvt.s32.f32 %v195
    %v228 = vcvt.s32.f32 %v196
    %v229 = vcvt.s32.f32 %v197
    %v230 = vcvt.s32.f32 %v198
    %v231 = vld [vmem:[%s2] sm:$0x3]
    %v233 = vlaneseq
    %v234 = vshrl.u32 %v233, 7
    %v235 = vsub.s32 0, %v234
    %v236 = vrot.slane %v231, %v235
    %v237 = vlaneseq
    %v238 = vshrl.u32 %v237, 7
    %v239 = vsub.s32 1, %v238
    %v240 = vrot.slane %v231, %v239
    %243 = vmatprep.subr.mxu0 0.0
    %244 = vmatpush1.msra.mxu0 %v199
    %245 = vmatprep.subr.mxu0 0.0
    %246 = vmatpush1.msra.mxu0 %v200
    %247 = vmatprep.subr.mxu0 0.0
    %248 = vmatpush1.msra.mxu0 %v201
    %249 = vmatprep.subr.mxu0 0.0
    %250 = vmatpush1.msra.mxu0 %v202
    %251 = vmatprep.subr.mxu0 0.0
    %252 = vmatpush1.msra.mxu0 %v203
    %253 = vmatprep.subr.mxu0 0.0
    %254 = vmatpush1.msra.mxu0 %v204
    %255 = vmatprep.subr.mxu0 0.0
    %256 = vmatpush1.msra.mxu0 %v205
    %257 = vmatprep.subr.mxu0 0.0
    %258 = vmatpush1.msra.mxu0 %v206
    %259 = vmatprep.subr.mxu0 0.0
    %260 = vmatpush1.msra.mxu0 %v207
    %261 = vmatprep.subr.mxu0 0.0
    %262 = vmatpush1.msra.mxu0 %v208
    %263 = vmatprep.subr.mxu0 0.0
    %264 = vmatpush1.msra.mxu0 %v209
    %265 = vmatprep.subr.mxu0 0.0
    %266 = vmatpush1.msra.mxu0 %v210
    %267 = vmatprep.subr.mxu0 0.0
    %268 = vmatpush1.msra.mxu0 %v211
    %269 = vmatprep.subr.mxu0 0.0
    %270 = vmatpush1.msra.mxu0 %v212
    %271 = vmatprep.subr.mxu0 0.0
    %272 = vmatpush1.msra.mxu0 %v213
    %273 = vmatprep.subr.mxu0 0.0
    %274 = vmatpush1.msra.mxu0 %v214
    %275 = vmatprep.subr.mxu0 0.0
    %276 = vmatpush1.msra.mxu0 %v215
    %277 = vmatprep.subr.mxu0 0.0
    %278 = vmatpush1.msra.mxu0 %v216
    %279 = vmatprep.subr.mxu0 0.0
    %280 = vmatpush1.msra.mxu0 %v217
    %281 = vmatprep.subr.mxu0 0.0
    %282 = vmatpush1.msra.mxu0 %v218
    %283 = vmatprep.subr.mxu0 0.0
    %284 = vmatpush1.msra.mxu0 %v219
    %285 = vmatprep.subr.mxu0 0.0
    %286 = vmatpush1.msra.mxu0 %v220
    %287 = vmatprep.subr.mxu0 0.0
    %288 = vmatpush1.msra.mxu0 %v221
    %289 = vmatprep.subr.mxu0 0.0
    %290 = vmatpush1.msra.mxu0 %v222
    %291 = vmatprep.subr.mxu0 0.0
    %292 = vmatpush1.msra.mxu0 %v223
    %293 = vmatprep.subr.mxu0 0.0
    %294 = vmatpush1.msra.mxu0 %v224
    %295 = vmatprep.subr.mxu0 0.0
    %296 = vmatpush1.msra.mxu0 %v225
    %297 = vmatprep.subr.mxu0 0.0
    %298 = vmatpush1.msra.mxu0 %v226
    %299 = vmatprep.subr.mxu0 0.0
    %300 = vmatpush1.msra.mxu0 %v227
    %301 = vmatprep.subr.mxu0 0.0
    %302 = vmatpush1.msra.mxu0 %v228
    %303 = vmatprep.subr.mxu0 0.0
    %304 = vmatpush1.msra.mxu0 %v229
    %305 = vmatprep.subr.mxu0 0.0
    %306 = vmatpush1.msra.mxu0 %v230
    %307 = vmatprep.mubr.f32.mxu0 %v240
    %308 = vmatmul.mubr.f32.gmra.mrb[0].mxu0 %v236
    %v309 = vpop.f32.mrb[0].mxu0
    %v310 = vadd.f32 0.0, %v309
    %v311 = vpop.f32.mrb[0].mxu0
    %312 = vdwg.mxu0
    %v313 = vxor.u32 %v310, 2147483648
    %v314 = vmul.f32 %v313, 1.442695
    %v315 = vpow.pop %v314
    %v316 = vadd.f32 %v315, 1.0
    %v317 = vrcp.pop %v316
    %v318 = vmul.f32 1.0, %v317
    %vm319 = vcmask 73728
    %320 = vst.msk [vmem:[#allocation5] sm:$0x1] %vm319, %v318
    // Predicated region
    $region18: #{tpu_custom_call.1} parent=1 // pred_check
      _
    $region19: #{tpu_custom_call.1} parent=1 // pred_check_branch
      %322 = sbr.rel (0) target = $region21
    $region20: #{tpu_custom_call.1} parent=1 // pred_region
      %s324 = ssub.s32 16, 16
      %325 = vsyncadd [#allocation4], %s324
      %s327 = sshll.u32 [#allocation5], 4
      %s328 = int_to_ptr.vmem [resolvable:$true] %s327
      %330 = dma.vmem_to_hbm [thread:$0]  %s328, 16, %s3, [#allocation4]
    $region21: #{tpu_custom_call.1} parent=1 // pred_fallthru
      _
    // Predicated region
    $region22: #{tpu_custom_call.1} parent=1 // pred_check
      _
    $region23: #{tpu_custom_call.1} parent=1 // pred_check_branch
      %332 = sbr.rel (0) target = $region25
    $region24: #{tpu_custom_call.1} parent=1 // pred_region
      %333 = dma.done [#allocation4], 16
    $region25: #{tpu_custom_call.1} parent=1 // pred_fallthru
      _
    %334 = vsyncpa [#allocation3], 1
    %335 = vsyncpa [#allocation4], 1

</llo_original>
